<compile_context>
chip_gen: v6e
topology: v6e:2x2x1
jax: 0.10.0
libtpu: 0.0.40
codegen_flags: <defaults>
</compile_context>

<pallas_src>
import math
import functools

import jax
import jax.numpy as jnp
from jax.experimental import pallas as pl
from jax.experimental.pallas import tpu as pltpu


def _round_up(x, m):
    return ((x + m - 1) // m) * m


def _gelu(x, approximate):
    if approximate:
        # tanh form -> EUP (separate VLIW slot); not bit-identical to nn.GELU()
        return jax.nn.gelu(x, approximate=True)
    # torch.nn.GELU(approximate='none'):  0.5 * x * (1 + erf(x / sqrt(2)))
    return 0.5 * x * (1.0 + jax.lax.erf(x * (1.0 / math.sqrt(2.0))))


def fcblock_kernel(x_ref, w0_ref, b0_ref, w1_ref, b1_ref, w2_ref, b2_ref, o_ref,
                   *, sub_b, approximate_gelu):
    # Weights/biases are whole-array resident blocks (constant index_map).
    w0 = w0_ref[...]
    w1 = w1_ref[...]
    w2 = w2_ref[...]
    cdt = w0.dtype  # MXU operand dtype (f32 or bf16, chosen in the wrapper)

    # Hoist the bias broadcasts out of the unrolled sub-chunk loop.
    # Biases and accumulation stay f32 regardless of compute_dtype.
    b0 = jnp.broadcast_to(b0_ref[...], (sub_b, w0.shape[1]))
    b1 = jnp.broadcast_to(b1_ref[...], (sub_b, w1.shape[1]))
    b2 = jnp.broadcast_to(b2_ref[...], (sub_b, w2.shape[1]))

    n_sub = x_ref.shape[0] // sub_b

    def body(j, carry):
        r = pl.multiple_of(j * sub_b, sub_b)
        xs = x_ref[pl.ds(r, sub_b), :]

        # hidden layer 0: Linear + GELU   (f32 accumulation on the MXU)
        h = jnp.dot(xs, w0, preferred_element_type=jnp.float32) + b0
        h = _gelu(h, approximate_gelu).astype(cdt)

        # hidden layer 1: Linear + GELU
        h = jnp.dot(h, w1, preferred_element_type=jnp.float32) + b1
        h = _gelu(h, approximate_gelu).astype(cdt)

        # output layer: Linear only (last_nonlinearity=None).
        # True-width store: only out_features real lanes ever hit HBM.
        out = jnp.dot(h, w2, preferred_element_type=jnp.float32) + b2
        o_ref[pl.ds(r, sub_b), :] = out.astype(o_ref.dtype)
        return carry

    jax.lax.fori_loop(0, n_sub, body, 0, unroll=True)


def fcblock_forward(x, params, *, tile_b=512, sub_b=128,
                    compute_dtype=None, approximate_gelu=False):
    """FCBlock forward: Linear -> GELU -> Linear -> GELU -> Linear.

    x: [B, in_features].  params: list of (W[in, out], b[1, out]).
    compute_dtype: MXU operand dtype. None/float32 = exact parity with torch;
      jnp.bfloat16 is the recommended perf path on v6e/v7x (accum stays f32).
    approximate_gelu: True = tanh GELU on the EUP (perf); False = exact erf.
    """
    (w0, b0), (w1, b1), (w2, b2) = params
    B, in_f = x.shape
    out_features = w2.shape[1]
    out_dtype = x.dtype
    compute_dtype = jnp.dtype(x.dtype if compute_dtype is None else compute_dtype)

    # --- batch tiling --------------------------------------------------------
    # Sublane alignment of the x block: 8 rows for 4-byte dtypes, 16 for 2-byte.
    row_align = 8 * max(1, 4 // compute_dtype.itemsize)
    if B <= 2 * tile_b:
        # Small batch: at most two *balanced* tiles so both v7x TensorCores get
        # real work instead of one full tile + one mostly-out-of-bounds tile.
        n_target = 2 if B > sub_b else 1
        tile_b = _round_up(max(1, (B + n_target - 1) // n_target), row_align)
    else:
        tile_b = _round_up(tile_b, row_align)
    n_tiles = pl.cdiv(B, tile_b)

    # Inner sub-chunk size (bounds live vregs at large tiles). Must divide
    # tile_b; at narrow feature widths a whole-tile chunk is fine.
    sub_b = min(sub_b, tile_b)
    if tile_b % sub_b != 0:
        sub_b = tile_b

    # --- MXU operand dtype (x + weights); biases / accumulation stay f32 -----
    if compute_dtype != x.dtype:
        x = x.astype(compute_dtype)
    w0c, w1c, w2c = (w.astype(compute_dtype) for w in (w0, w1, w2))

    # --- VMEM budget guard (resident weights are pipeline-double-buffered) ---
    bytes_w = sum(int(a.size) * a.dtype.itemsize
                  for a in (w0c, b0, w1c, b1, w2c, b2))
    bytes_io = tile_b * (in_f * compute_dtype.itemsize
                         + out_features * jnp.dtype(out_dtype).itemsize)
    vmem_est = 2 * (bytes_w + bytes_io)
    if vmem_est > (48 << 20):
        raise ValueError(
            "FCBlock weights too large for the resident-weight kernel "
            f"(~{vmem_est >> 20} MiB VMEM; v7x physical cap is 64 MiB). "
            "Cast weights to bf16 and/or add a K/N grid axis with a VMEM "
            "accumulator.")
    cp_kwargs = dict(dimension_semantics=("parallel",))
    if vmem_est > (24 << 20):
        cp_kwargs["vmem_limit_bytes"] = int(
            min(vmem_est * 5 // 4 + (4 << 20), 100 << 20))

    full = lambda arr: pl.BlockSpec(arr.shape, lambda i: (0, 0))
    kernel = functools.partial(
        fcblock_kernel, sub_b=sub_b, approximate_gelu=approximate_gelu)

    # Output emitted at its true shape: no lane padding, no batch padding, no
    # follow-up XLA slice. Ragged last batch tile is masked on writeback.
    return pl.pallas_call(
        kernel,
        out_shape=jax.ShapeDtypeStruct((B, out_features), out_dtype),
        grid_spec=pltpu.PrefetchScalarGridSpec(
            num_scalar_prefetch=0,
            grid=(n_tiles,),
            in_specs=[
                pl.BlockSpec((tile_b, in_f), lambda i: (i, 0)),
                full(w0c), full(b0),
                full(w1c), full(b1),
                full(w2c), full(b2),
            ],
            out_specs=pl.BlockSpec((tile_b, out_features), lambda i: (i, 0)),
        ),
        compiler_params=pltpu.CompilerParams(**cp_kwargs),
    )(x, w0c, b0, w1c, b1, w2c, b2)


def init_fcblock_params(key, in_features, features, out_features):
    """Deterministic synthetic init mirroring FCBlock's shapes.

    Hidden (GELU) layers use init_weights_selu: W ~ N(0, 1/sqrt(fan_in)),
    bias keeps PyTorch Linear default U(-1/sqrt(fan_in), 1/sqrt(fan_in)).
    Last layer (no nonlinearity) keeps PyTorch Linear default init.
    Weights are stored transposed as [in, out].
    """
    dims = [in_features] + list(features) + [out_features]
    params = []
    n_layers = len(dims) - 1
    for i in range(n_layers):
        fan_in, fan_out = dims[i], dims[i + 1]
        key, kw, kb = jax.random.split(key, 3)
        bound = 1.0 / math.sqrt(fan_in)
        if i < n_layers - 1:
            w = jax.random.normal(kw, (fan_in, fan_out), jnp.float32) / math.sqrt(fan_in)
        else:
            w = jax.random.uniform(kw, (fan_in, fan_out), jnp.float32, -bound, bound)
        b = jax.random.uniform(kb, (1, fan_out), jnp.float32, -bound, bound)
        params.append((w, b))
    return params


def fcblock_reference(x, params):
    """Pure-JAX reference of FCBlock.forward (gelu hidden, linear last)."""
    (w0, b0), (w1, b1), (w2, b2) = params
    h = _gelu(x @ w0 + b0, approximate=False)
    h = _gelu(h @ w1 + b1, approximate=False)
    return h @ w2 + b2


if __name__ == "__main__":
    in_features = 16
    features = [32, 32]
    out_features = 8
    batch = 300  # not a multiple of any tile -> exercises the ragged-block path

    key = jax.random.PRNGKey(0)
    key, kx, kx2 = jax.random.split(key, 3)
    x = jax.random.normal(kx, (batch, in_features), jnp.float32)
    params = init_fcblock_params(key, in_features, features, out_features)
    ref = fcblock_reference(x, params)

    # 1) Exact-parity path: f32 MXU operands + erf GELU (matches nn.GELU()).
    out = jax.block_until_ready(fcblock_forward(x, params))
    assert out.shape == (batch, out_features)
    assert jnp.allclose(out, ref, atol=1e-5, rtol=1e-5), (
        f"f32 max abs err = {jnp.max(jnp.abs(out - ref))}")

    # 2) Large-batch path: tile_b=512, unrolled 128-row sub-chunks, ragged tail.
    batch2 = 1100
    x2 = jax.random.normal(kx2, (batch2, in_features), jnp.float32)
    ref2 = fcblock_reference(x2, params)
    out2 = jax.block_until_ready(fcblock_forward(x2, params))
    assert out2.shape == (batch2, out_features)
    assert jnp.allclose(out2, ref2, atol=1e-5, rtol=1e-5), (
        f"large-batch f32 max abs err = {jnp.max(jnp.abs(out2 - ref2))}")

    # 3) Perf path (recommended on v6e/v7x): bf16 MXU operands + tanh GELU on
    #    the EUP. Deliberate precision trade-off -> looser tolerance.
    out_fast = jax.block_until_ready(
        fcblock_forward(x, params, compute_dtype=jnp.bfloat16,
                        approximate_gelu=True))
    assert out_fast.shape == (batch, out_features)
    assert jnp.allclose(out_fast, ref, atol=1e-1, rtol=1e-1), (
        f"fast-path max abs err = {jnp.max(jnp.abs(out_fast - ref))}")

    print("KERNEL_OK")
</pallas_src>

<mosaic_0001>
module attributes {stable_mosaic.version = 11 : i64} {
  func.func @fcblock_kernel(%arg0: i32, %arg1: memref<152x16xf32, #tpu.memory_space<vmem>>, %arg2: memref<16x32xf32, #tpu.memory_space<vmem>>, %arg3: memref<1x32xf32, #tpu.memory_space<vmem>>, %arg4: memref<32x32xf32, #tpu.memory_space<vmem>>, %arg5: memref<1x32xf32, #tpu.memory_space<vmem>>, %arg6: memref<32x8xf32, #tpu.memory_space<vmem>>, %arg7: memref<1x8xf32, #tpu.memory_space<vmem>>, %arg8: memref<152x8xf32, #tpu.memory_space<vmem>>) attributes {dimension_semantics = [#tpu.dimension_semantics<parallel>], iteration_bounds = array<i64: 2>, scalar_prefetch = 0 : i64, scratch_operands = 0 : i64, tpu.core_type = #tpu.core_type<tc>, window_params = [{transform_indices = @transform_0, window_bounds = array<i64: 152, 16>}, {pipeline_mode = #tpu.pipeline_mode<synchronous>, transform_indices = @transform_1, window_bounds = array<i64: 16, 32>}, {pipeline_mode = #tpu.pipeline_mode<synchronous>, transform_indices = @transform_2, window_bounds = array<i64: 1, 32>}, {pipeline_mode = #tpu.pipeline_mode<synchronous>, transform_indices = @transform_3, window_bounds = array<i64: 32, 32>}, {pipeline_mode = #tpu.pipeline_mode<synchronous>, transform_indices = @transform_4, window_bounds = array<i64: 1, 32>}, {pipeline_mode = #tpu.pipeline_mode<synchronous>, transform_indices = @transform_5, window_bounds = array<i64: 32, 8>}, {pipeline_mode = #tpu.pipeline_mode<synchronous>, transform_indices = @transform_6, window_bounds = array<i64: 1, 8>}, {transform_indices = @transform_7, window_bounds = array<i64: 152, 8>}]} {
    %c0 = arith.constant 0 : index
    %c0_0 = arith.constant 0 : index
    %0 = vector.load %arg2[%c0, %c0_0] : memref<16x32xf32, #tpu.memory_space<vmem>>, vector<16x32xf32>
    %c0_1 = arith.constant 0 : index
    %c0_2 = arith.constant 0 : index
    %1 = vector.load %arg4[%c0_1, %c0_2] : memref<32x32xf32, #tpu.memory_space<vmem>>, vector<32x32xf32>
    %c0_3 = arith.constant 0 : index
    %c0_4 = arith.constant 0 : index
    %2 = vector.load %arg6[%c0_3, %c0_4] : memref<32x8xf32, #tpu.memory_space<vmem>>, vector<32x8xf32>
    %c0_5 = arith.constant 0 : index
    %c0_6 = arith.constant 0 : index
    %3 = vector.load %arg3[%c0_5, %c0_6] : memref<1x32xf32, #tpu.memory_space<vmem>>, vector<1x32xf32>
    %4 = vector.shape_cast %3 : vector<1x32xf32> to vector<1x32xf32>
    %5 = vector.broadcast %4 : vector<1x32xf32> to vector<152x32xf32>
    %c0_7 = arith.constant 0 : index
    %c0_8 = arith.constant 0 : index
    %6 = vector.load %arg5[%c0_7, %c0_8] : memref<1x32xf32, #tpu.memory_space<vmem>>, vector<1x32xf32>
    %7 = vector.shape_cast %6 : vector<1x32xf32> to vector<1x32xf32>
    %8 = vector.broadcast %7 : vector<1x32xf32> to vector<152x32xf32>
    %c0_9 = arith.constant 0 : index
    %c0_10 = arith.constant 0 : index
    %9 = vector.load %arg7[%c0_9, %c0_10] : memref<1x8xf32, #tpu.memory_space<vmem>>, vector<1x8xf32>
    %10 = vector.shape_cast %9 : vector<1x8xf32> to vector<1x8xf32>
    %11 = vector.broadcast %10 : vector<1x8xf32> to vector<152x8xf32>
    %c0_i32 = arith.constant 0 : i32
    %c152_i32 = arith.constant 152 : i32
    %12 = arith.muli %c0_i32, %c152_i32 : i32
    %13 = tpu.assume_multiple %12, 152 : i32
    %14 = arith.index_cast %13 : i32 to index
    %c0_11 = arith.constant 0 : index
    %15 = vector.load %arg1[%14, %c0_11] : memref<152x16xf32, #tpu.memory_space<vmem>>, vector<152x16xf32>
    %cst = arith.constant dense<0.000000e+00> : vector<152x32xf32>
    %16 = tpu.matmul %15, %0, %cst {dimension_numbers = #tpu.dot_dimension_numbers<[1], [0], [0], [1], [0, 0, 1, 1], [], []>} : vector<152x16xf32>, vector<16x32xf32>, vector<152x32xf32> -> vector<152x32xf32>
    %17 = arith.addf %16, %5 : vector<152x32xf32>
    %cst_12 = arith.constant 5.000000e-01 : f32
    %18 = vector.broadcast %cst_12 : f32 to vector<152x32xf32>
    %19 = arith.mulf %18, %17 : vector<152x32xf32>
    %cst_13 = arith.constant 0.707106769 : f32
    %20 = vector.broadcast %cst_13 : f32 to vector<152x32xf32>
    %21 = arith.mulf %17, %20 : vector<152x32xf32>
    %22 = math.erf %21 : vector<152x32xf32>
    %cst_14 = arith.constant 1.000000e+00 : f32
    %23 = vector.broadcast %cst_14 : f32 to vector<152x32xf32>
    %24 = arith.addf %23, %22 : vector<152x32xf32>
    %25 = arith.mulf %19, %24 : vector<152x32xf32>
    %cst_15 = arith.constant dense<0.000000e+00> : vector<152x32xf32>
    %26 = tpu.matmul %25, %1, %cst_15 {dimension_numbers = #tpu.dot_dimension_numbers<[1], [0], [0], [1], [0, 0, 1, 1], [], []>} : vector<152x32xf32>, vector<32x32xf32>, vector<152x32xf32> -> vector<152x32xf32>
    %27 = arith.addf %26, %8 : vector<152x32xf32>
    %cst_16 = arith.constant 5.000000e-01 : f32
    %28 = vector.broadcast %cst_16 : f32 to vector<152x32xf32>
    %29 = arith.mulf %28, %27 : vector<152x32xf32>
    %cst_17 = arith.constant 0.707106769 : f32
    %30 = vector.broadcast %cst_17 : f32 to vector<152x32xf32>
    %31 = arith.mulf %27, %30 : vector<152x32xf32>
    %32 = math.erf %31 : vector<152x32xf32>
    %cst_18 = arith.constant 1.000000e+00 : f32
    %33 = vector.broadcast %cst_18 : f32 to vector<152x32xf32>
    %34 = arith.addf %33, %32 : vector<152x32xf32>
    %35 = arith.mulf %29, %34 : vector<152x32xf32>
    %cst_19 = arith.constant dense<0.000000e+00> : vector<152x8xf32>
    %36 = tpu.matmul %35, %2, %cst_19 {dimension_numbers = #tpu.dot_dimension_numbers<[1], [0], [0], [1], [0, 0, 1, 1], [], []>} : vector<152x32xf32>, vector<32x8xf32>, vector<152x8xf32> -> vector<152x8xf32>
    %37 = arith.addf %36, %11 : vector<152x8xf32>
    %38 = arith.index_cast %13 : i32 to index
    %c0_20 = arith.constant 0 : index
    %39 = vector.load %arg8[%38, %c0_20] : memref<152x8xf32, #tpu.memory_space<vmem>>, vector<152x8xf32>
    tpu.vector_store %arg8[%38, %c0_20], %37 {strides = array<i32>} : memref<152x8xf32, #tpu.memory_space<vmem>>, vector<152x8xf32>,
    %c1_i32 = arith.constant 1 : i32
    return
  }
  func.func @transform_0(%arg0: i32) -> (i32, i32) {
    %c0_i32 = arith.constant 0 : i32
    %c0_i32_0 = arith.constant 0 : i32
    return %arg0, %c0_i32 : i32, i32
  }
  func.func @transform_1(%arg0: i32) -> (i32, i32) {
    %c0_i32 = arith.constant 0 : i32
    %c0_i32_0 = arith.constant 0 : i32
    %c0_i32_1 = arith.constant 0 : i32
    return %c0_i32, %c0_i32_0 : i32, i32
  }
  func.func @transform_2(%arg0: i32) -> (i32, i32) {
    %c0_i32 = arith.constant 0 : i32
    %c0_i32_0 = arith.constant 0 : i32
    %c0_i32_1 = arith.constant 0 : i32
    return %c0_i32, %c0_i32_0 : i32, i32
  }
  func.func @transform_3(%arg0: i32) -> (i32, i32) {
    %c0_i32 = arith.constant 0 : i32
    %c0_i32_0 = arith.constant 0 : i32
    %c0_i32_1 = arith.constant 0 : i32
    return %c0_i32, %c0_i32_0 : i32, i32
  }
  func.func @transform_4(%arg0: i32) -> (i32, i32) {
    %c0_i32 = arith.constant 0 : i32
    %c0_i32_0 = arith.constant 0 : i32
    %c0_i32_1 = arith.constant 0 : i32
    return %c0_i32, %c0_i32_0 : i32, i32
  }
  func.func @transform_5(%arg0: i32) -> (i32, i32) {
    %c0_i32 = arith.constant 0 : i32
    %c0_i32_0 = arith.constant 0 : i32
    %c0_i32_1 = arith.constant 0 : i32
    return %c0_i32, %c0_i32_0 : i32, i32
  }
  func.func @transform_6(%arg0: i32) -> (i32, i32) {
    %c0_i32 = arith.constant 0 : i32
    %c0_i32_0 = arith.constant 0 : i32
    %c0_i32_1 = arith.constant 0 : i32
    return %c0_i32, %c0_i32_0 : i32, i32
  }
  func.func @transform_7(%arg0: i32) -> (i32, i32) {
    %c0_i32 = arith.constant 0 : i32
    %c0_i32_0 = arith.constant 0 : i32
    return %arg0, %c0_i32 : i32, i32
  }
}

</mosaic_0001>

<llo_original>
// kernel: tpu_custom_call.1
$region0: #{tpu_custom_call.1}
  #allocation0 [shape = 'u32[]', space=smem, size = 0x4, offset = 0x4, fixed_abs, tag = 'smem constant byte address 0x4 - core index']
  #allocation1 [shape = 'u32[144,128]{1,0:T(1,128)}', space=vmem, size = 0x12000, scoped, tag = 'internal scratch']
  %s0 = inlined_call_operand.vmem [shape: f32[300,16], index: 0, kind: input, shape index: {}]
  %s1 = inlined_call_operand.vmem [shape: f32[16,32], index: 1, kind: input, shape index: {}]
  %s2 = inlined_call_operand.vmem [shape: f32[1,32], index: 2, kind: input, shape index: {}]
  %s3 = inlined_call_operand.vmem [shape: f32[32,32], index: 3, kind: input, shape index: {}]
  %s4 = inlined_call_operand.vmem [shape: f32[1,32], index: 4, kind: input, shape index: {}]
  %s5 = inlined_call_operand.vmem [shape: f32[32,8], index: 5, kind: input, shape index: {}]
  %s6 = inlined_call_operand.vmem [shape: f32[1,8], index: 6, kind: input, shape index: {}]
  %s7 = inlined_call_operand.vmem [shape: f32[300,8], index: 7, kind: output, shape index: {}]
  %s8 = sld [smem:[#allocation0]]
  $region61: #{tpu_custom_call.1} parent=0
    _
  %s10 = ssub.s32 1, %s8
  %s11 = scalar_select 0, %s10, %s8
  loop: start=0, step=1, limit=4
  $region2: #{tpu_custom_call.1} parent=0 // loop_pre_header
    _
  $region3: #{tpu_custom_call.1} parent=0 // loop_header
    %s13 = sphi 0, %s17
    %p14 = scmp.ge.s32.totalorder %s13, 4
    %s23 = sphi 0, %s25
    %s26 = sphi 0, %s23
    %s27 = sphi 0, %s26
    %s43 = sphi 0, %s27
    %s47 = sphi 0, %s47
    %s49 = sphi 0, %s47
    %s50 = sphi 0, %s49
    %s64 = sphi 0, %s50
    %s68 = sphi 0, %s68
    %s70 = sphi 0, %s68
    %s71 = sphi 0, %s70
    %s85 = sphi 0, %s71
    %s89 = sphi 0, %s89
    %s91 = sphi 0, %s89
    %s92 = sphi 0, %s91
    %s106 = sphi 0, %s92
    %s110 = sphi 0, %s110
    %s112 = sphi 0, %s110
    %s113 = sphi 0, %s112
    %s127 = sphi 0, %s113
    %s131 = sphi 0, %s131
    %s133 = sphi 0, %s131
    %s134 = sphi 0, %s133
    %s148 = sphi 0, %s134
    %s152 = sphi 0, %s152
    %s154 = sphi 0, %s152
    %s155 = sphi 0, %s154
    %s169 = sphi 0, %s155
    %s175 = sphi 0, %s177
    %s178 = sphi 0, %s175
    %s179 = sphi 0, %s178
    %s195 = sphi 0, %s179
  $region4: #{tpu_custom_call.1} parent=0 // loop_header_branch
    %16 = sbr.rel (%p14) target = $region8
  $region5: #{tpu_custom_call.1} parent=0 // loop_body
    %s18 = ssub.s32 %s13, 1
    %s19 = ssub.s32 %s13, 2
    %s20 = sadd.s32 %s13, 1
    %s21 = ssub.s32 %s13, %s20
    %p22 = scmp.eq.s32.totalorder %s21, 0
    %s24 = sadd.s32 %s23, 1
    %s25 = scalar_select %p22, %s23, %s24
    %p28 = pneg %p22
    %p29 = scmp.eq.s32.totalorder %s13, 1
    %p30 = por %p28, %p29
    %p31 = scmp.ne.s32.totalorder %s23, %s26
    %p32 = scmp.eq.s32.totalorder %s13, 0
    %p33 = por %p31, %p32
    %p34 = scmp.ne.s32.totalorder %s23, %s26
    %p35 = scmp.eq.s32.totalorder %s18, 1
    %p36 = por %p34, %p35
    %p37 = scmp.ne.s32.totalorder %s26, %s27
    %p38 = scmp.eq.s32.totalorder %s18, 0
    %p39 = por %p37, %p38
    %p40 = scmp.ne.s32.totalorder %s26, %s27
    %p41 = scmp.eq.s32.totalorder %s19, 1
    %p42 = por %p40, %p41
    %p44 = scmp.ne.s32.totalorder %s27, %s43
    %p45 = scmp.eq.s32.totalorder %s19, 0
    %p46 = por %p44, %p45
    %s48 = sadd.s32 %s47, 1
    %p51 = scmp.eq.s32.totalorder %s13, 1
    %p52 = scmp.ne.s32.totalorder %s47, %s49
    %p53 = scmp.eq.s32.totalorder %s13, 0
    %p54 = por %p52, %p53
    %p55 = scmp.ne.s32.totalorder %s47, %s49
    %p56 = scmp.eq.s32.totalorder %s18, 1
    %p57 = por %p55, %p56
    %p58 = scmp.ne.s32.totalorder %s49, %s50
    %p59 = scmp.eq.s32.totalorder %s18, 0
    %p60 = por %p58, %p59
    %p61 = scmp.ne.s32.totalorder %s49, %s50
    %p62 = scmp.eq.s32.totalorder %s19, 1
    %p63 = por %p61, %p62
    %p65 = scmp.ne.s32.totalorder %s50, %s64
    %p66 = scmp.eq.s32.totalorder %s19, 0
    %p67 = por %p65, %p66
    %s69 = sadd.s32 %s68, 1
    %p72 = scmp.eq.s32.totalorder %s13, 1
    %p73 = scmp.ne.s32.totalorder %s68, %s70
    %p74 = scmp.eq.s32.totalorder %s13, 0
    %p75 = por %p73, %p74
    %p76 = scmp.ne.s32.totalorder %s68, %s70
    %p77 = scmp.eq.s32.totalorder %s18, 1
    %p78 = por %p76, %p77
    %p79 = scmp.ne.s32.totalorder %s70, %s71
    %p80 = scmp.eq.s32.totalorder %s18, 0
    %p81 = por %p79, %p80
    %p82 = scmp.ne.s32.totalorder %s70, %s71
    %p83 = scmp.eq.s32.totalorder %s19, 1
    %p84 = por %p82, %p83
    %p86 = scmp.ne.s32.totalorder %s71, %s85
    %p87 = scmp.eq.s32.totalorder %s19, 0
    %p88 = por %p86, %p87
    %s90 = sadd.s32 %s89, 1
    %p93 = scmp.eq.s32.totalorder %s13, 1
    %p94 = scmp.ne.s32.totalorder %s89, %s91
    %p95 = scmp.eq.s32.totalorder %s13, 0
    %p96 = por %p94, %p95
    %p97 = scmp.ne.s32.totalorder %s89, %s91
    %p98 = scmp.eq.s32.totalorder %s18, 1
    %p99 = por %p97, %p98
    %p100 = scmp.ne.s32.totalorder %s91, %s92
    %p101 = scmp.eq.s32.totalorder %s18, 0
    %p102 = por %p100, %p101
    %p103 = scmp.ne.s32.totalorder %s91, %s92
    %p104 = scmp.eq.s32.totalorder %s19, 1
    %p105 = por %p103, %p104
    %p107 = scmp.ne.s32.totalorder %s92, %s106
    %p108 = scmp.eq.s32.totalorder %s19, 0
    %p109 = por %p107, %p108
    %s111 = sadd.s32 %s110, 1
    %p114 = scmp.eq.s32.totalorder %s13, 1
    %p115 = scmp.ne.s32.totalorder %s110, %s112
    %p116 = scmp.eq.s32.totalorder %s13, 0
    %p117 = por %p115, %p116
    %p118 = scmp.ne.s32.totalorder %s110, %s112
    %p119 = scmp.eq.s32.totalorder %s18, 1
    %p120 = por %p118, %p119
    %p121 = scmp.ne.s32.totalorder %s112, %s113
    %p122 = scmp.eq.s32.totalorder %s18, 0
    %p123 = por %p121, %p122
    %p124 = scmp.ne.s32.totalorder %s112, %s113
    %p125 = scmp.eq.s32.totalorder %s19, 1
    %p126 = por %p124, %p125
    %p128 = scmp.ne.s32.totalorder %s113, %s127
    %p129 = scmp.eq.s32.totalorder %s19, 0
    %p130 = por %p128, %p129
    %s132 = sadd.s32 %s131, 1
    %p135 = scmp.eq.s32.totalorder %s13, 1
    %p136 = scmp.ne.s32.totalorder %s131, %s133
    %p137 = scmp.eq.s32.totalorder %s13, 0
    %p138 = por %p136, %p137
    %p139 = scmp.ne.s32.totalorder %s131, %s133
    %p140 = scmp.eq.s32.totalorder %s18, 1
    %p141 = por %p139, %p140
    %p142 = scmp.ne.s32.totalorder %s133, %s134
    %p143 = scmp.eq.s32.totalorder %s18, 0
    %p144 = por %p142, %p143
    %p145 = scmp.ne.s32.totalorder %s133, %s134
    %p146 = scmp.eq.s32.totalorder %s19, 1
    %p147 = por %p145, %p146
    %p149 = scmp.ne.s32.totalorder %s134, %s148
    %p150 = scmp.eq.s32.totalorder %s19, 0
    %p151 = por %p149, %p150
    %s153 = sadd.s32 %s152, 1
    %p156 = scmp.eq.s32.totalorder %s13, 1
    %p157 = scmp.ne.s32.totalorder %s152, %s154
    %p158 = scmp.eq.s32.totalorder %s13, 0
    %p159 = por %p157, %p158
    %p160 = scmp.ne.s32.totalorder %s152, %s154
    %p161 = scmp.eq.s32.totalorder %s18, 1
    %p162 = por %p160, %p161
    %p163 = scmp.ne.s32.totalorder %s154, %s155
    %p164 = scmp.eq.s32.totalorder %s18, 0
    %p165 = por %p163, %p164
    %p166 = scmp.ne.s32.totalorder %s154, %s155
    %p167 = scmp.eq.s32.totalorder %s19, 1
    %p168 = por %p166, %p167
    %p170 = scmp.ne.s32.totalorder %s155, %s169
    %p171 = scmp.eq.s32.totalorder %s19, 0
    %p172 = por %p170, %p171
    %s173 = ssub.s32 %s13, %s20
    %p174 = scmp.eq.s32.totalorder %s173, 0
    %s176 = sadd.s32 %s175, 1
    %s177 = scalar_select %p174, %s175, %s176
    %p180 = pneg %p174
    %p181 = scmp.eq.s32.totalorder %s13, 1
    %p182 = por %p180, %p181
    %p183 = scmp.ne.s32.totalorder %s175, %s178
    %p184 = scmp.eq.s32.totalorder %s13, 0
    %p185 = por %p183, %p184
    %p186 = scmp.ne.s32.totalorder %s175, %s178
    %p187 = scmp.eq.s32.totalorder %s18, 1
    %p188 = por %p186, %p187
    %p189 = scmp.ne.s32.totalorder %s178, %s179
    %p190 = scmp.eq.s32.totalorder %s18, 0
    %p191 = por %p189, %p190
    %p192 = scmp.ne.s32.totalorder %s178, %s179
    %p193 = scmp.eq.s32.totalorder %s19, 1
    %p194 = por %p192, %p193
    %p196 = scmp.ne.s32.totalorder %s179, %s195
    %p197 = scmp.eq.s32.totalorder %s19, 0
    %p198 = por %p196, %p197
    %p199 = scmp.le.s32.totalorder 1, %s13
    %p200 = scmp.lt.s32.totalorder %s13, 3
    %p201 = pnand %p199, %p200
    %p202 = pneg %p201
    // Predicated region
    $region9: #{tpu_custom_call.1} parent=5 // pred_check
      _
    $region10: #{tpu_custom_call.1} parent=5 // pred_check_branch
      %204 = sbr.rel (%p201) target = $region12
    $region11: #{tpu_custom_call.1} parent=5 // pred_region
      %s205 = ssub.s32 %s13, 1
      // Predicated region
      $region13: #{tpu_custom_call.1} parent=11 // pred_check
        %p206 = pneg %p60
      $region14: #{tpu_custom_call.1} parent=11 // pred_check_branch
        %208 = sbr.rel (%p206) target = $region16
      $region15: #{tpu_custom_call.1} parent=11 // pred_region
        _
      $region16: #{tpu_custom_call.1} parent=11 // pred_fallthru
        _
      // Predicated region
      $region17: #{tpu_custom_call.1} parent=11 // pred_check
        %p209 = pneg %p81
      $region18: #{tpu_custom_call.1} parent=11 // pred_check_branch
        %211 = sbr.rel (%p209) target = $region20
      $region19: #{tpu_custom_call.1} parent=11 // pred_region
        _
      $region20: #{tpu_custom_call.1} parent=11 // pred_fallthru
        _
      // Predicated region
      $region21: #{tpu_custom_call.1} parent=11 // pred_check
        %p212 = pneg %p102
      $region22: #{tpu_custom_call.1} parent=11 // pred_check_branch
        %214 = sbr.rel (%p212) target = $region24
      $region23: #{tpu_custom_call.1} parent=11 // pred_region
        _
      $region24: #{tpu_custom_call.1} parent=11 // pred_fallthru
        _
      // Predicated region
      $region25: #{tpu_custom_call.1} parent=11 // pred_check
        %p215 = pneg %p123
      $region26: #{tpu_custom_call.1} parent=11 // pred_check_branch
        %217 = sbr.rel (%p215) target = $region28
      $region27: #{tpu_custom_call.1} parent=11 // pred_region
        _
      $region28: #{tpu_custom_call.1} parent=11 // pred_fallthru
        _
      // Predicated region
      $region29: #{tpu_custom_call.1} parent=11 // pred_check
        %p218 = pneg %p144
      $region30: #{tpu_custom_call.1} parent=11 // pred_check_branch
        %220 = sbr.rel (%p218) target = $region32
      $region31: #{tpu_custom_call.1} parent=11 // pred_region
        _
      $region32: #{tpu_custom_call.1} parent=11 // pred_fallthru
        _
      // Predicated region
      $region33: #{tpu_custom_call.1} parent=11 // pred_check
        %p221 = pneg %p165
      $region34: #{tpu_custom_call.1} parent=11 // pred_check_branch
        %223 = sbr.rel (%p221) target = $region36
      $region35: #{tpu_custom_call.1} parent=11 // pred_region
        _
      $region36: #{tpu_custom_call.1} parent=11 // pred_fallthru
        _
    $region12: #{tpu_custom_call.1} parent=5 // pred_fallthru
      _
    %p224 = scmp.lt.s32.totalorder %s13, 2
    // Predicated region
    $region37: #{tpu_custom_call.1} parent=5 // pred_check
      %p225 = pneg %p224
    $region38: #{tpu_custom_call.1} parent=5 // pred_check_branch
      %227 = sbr.rel (%p225) target = $region40
    $region39: #{tpu_custom_call.1} parent=5 // pred_region
      // Predicated region
      $region41: #{tpu_custom_call.1} parent=39 // pred_check
        %p228 = pneg %p33
      $region42: #{tpu_custom_call.1} parent=39 // pred_check_branch
        %230 = sbr.rel (%p228) target = $region44
      $region43: #{tpu_custom_call.1} parent=39 // pred_region
        %s231 = smul.u32 19, %s13
        %p232 = scmp.lt.s32.totalorder %s231, 37
        %s233 = scalar_select %p232, %s231, 37
        %s234 = smul.addr %s233, 8
        %s235 = scalar_lea.vmem %s0, %s234
        %s236 = smul.u32 19, %s13
      $region44: #{tpu_custom_call.1} parent=39 // pred_fallthru
        _
    $region40: #{tpu_custom_call.1} parent=5 // pred_fallthru
      _
    %p237 = scmp.le.s32.totalorder 1, %s13
    %p238 = scmp.lt.s32.totalorder %s13, 3
    %p239 = pnand %p237, %p238
    %p240 = pneg %p239
    // Predicated region
    $region45: #{tpu_custom_call.1} parent=5 // pred_check
      _
    $region46: #{tpu_custom_call.1} parent=5 // pred_check_branch
      %242 = sbr.rel (%p239) target = $region48
    $region47: #{tpu_custom_call.1} parent=5 // pred_region
      %s243 = ssub.s32 %s13, 1
      %s244 = smul.u32 19, %s18
      %p245 = scmp.lt.s32.totalorder %s244, 37
      %s246 = scalar_select %p245, %s244, 37
      %s247 = smul.addr %s246, 8
      %s248 = scalar_lea.vmem %s0, %s247
      %p249 = pneg %p39
      %p250 = pneg %p36
      %p251 = pneg %p60
      %p252 = pneg %p57
      %p253 = pneg %p81
      %p254 = pneg %p78
      %p255 = pneg %p102
      %p256 = pneg %p99
      %p257 = pneg %p123
      %p258 = pneg %p120
      %p259 = pneg %p144
      %p260 = pneg %p141
      %p261 = pneg %p165
      %p262 = pneg %p162
      %p263 = pneg %p191
      %p264 = pneg %p188
      %s265 = smul.u32 19, %s18
      %p266 = scmp.lt.s32.totalorder %s265, 37
      %s267 = scalar_select %p266, %s265, 37
      %s268 = smul.addr %s267, 8
      %s269 = scalar_lea.vmem %s7, %s268
      %s270 = smul.u32 19, %s18
      %p271 = scmp.lt.s32.totalorder %s270, 37
      %s272 = scalar_select %p271, %s270, 37
      %s273 = smul.addr %s272, 8
      %s274 = scalar_lea.vmem %s0, %s273
      %s275 = smul.u32 19, %s18
      %s276 = smul.u32 19, %s18
      %p277 = scmp.lt.s32.totalorder %s276, 37
      %s278 = scalar_select %p277, %s276, 37
      %s279 = smul.addr %s278, 8
      %s280 = scalar_lea.vmem %s7, %s279
      %s281 = smul.u32 19, %s18
      %v282 = vld [vmem:[%s1] sm:$0xff]
      %v283 = vld [vmem:[%s1 + $0x8] sm:$0xff]
      %v284 = vld [vmem:[%s3] sm:$0xff]
      %v285 = vld [vmem:[%s3 + $0x8] sm:$0xff]
      %v286 = vld [vmem:[%s3 + $0x10] sm:$0xff]
      %v287 = vld [vmem:[%s3 + $0x18] sm:$0xff]
      %v288 = vld [vmem:[%s5] sm:$0xff]
      %v289 = vld [vmem:[%s5 + $0x8] sm:$0xff]
      %v290 = vld [vmem:[%s5 + $0x10] sm:$0xff]
      %v291 = vld [vmem:[%s5 + $0x18] sm:$0xff]
      %v292 = vld [vmem:[%s2] sm:$0x1]
      %v294 = vlaneseq
      %v295 = vshrl.u32 %v294, 7
      %v296 = vsub.s32 0, %v295
      %v297 = vrot.slane %v292, %v296
      %v299 = vld [vmem:[%s4] sm:$0x1]
      %v301 = vlaneseq
      %v302 = vshrl.u32 %v301, 7
      %v303 = vsub.s32 0, %v302
      %v304 = vrot.slane %v299, %v303
      %v306 = vld [vmem:[%s6] sm:$0x1]
      %v308 = vlaneseq
      %v309 = vshrl.u32 %v308, 7
      %v310 = vsub.s32 0, %v309
      %v311 = vrot.slane %v306, %v310
      %v313 = vld [vmem:[%s274] sm:$0xff]
      %v314 = vld [vmem:[%s274 + $0x8] sm:$0xff]
      %v315 = vld [vmem:[%s274 + $0x10] sm:$0xff]
      %v316 = vld [vmem:[%s274 + $0x18] sm:$0xff]
      %v317 = vld [vmem:[%s274 + $0x20] sm:$0xff]
      %v318 = vld [vmem:[%s274 + $0x28] sm:$0xff]
      %v319 = vld [vmem:[%s274 + $0x30] sm:$0xff]
      %v320 = vld [vmem:[%s274 + $0x38] sm:$0xff]
      %v321 = vld [vmem:[%s274 + $0x40] sm:$0xff]
      %v322 = vld [vmem:[%s274 + $0x48] sm:$0xff]
      %v323 = vld [vmem:[%s274 + $0x50] sm:$0xff]
      %v324 = vld [vmem:[%s274 + $0x58] sm:$0xff]
      %v325 = vld [vmem:[%s274 + $0x60] sm:$0xff]
      %v326 = vld [vmem:[%s274 + $0x68] sm:$0xff]
      %v327 = vld [vmem:[%s274 + $0x70] sm:$0xff]
      %v328 = vld [vmem:[%s274 + $0x78] sm:$0xff]
      %v329 = vld [vmem:[%s274 + $0x80] sm:$0xff]
      %v330 = vld [vmem:[%s274 + $0x88] sm:$0xff]
      %v331 = vld [vmem:[%s274 + $0x90] sm:$0xff]
      %vm332 = vcmask 130048
      %v334 = vsel %vm332, %v313, 0
      %v337 = vsel %vm332, %v314, 0
      %v340 = vsel %vm332, %v315, 0
      %v343 = vsel %vm332, %v316, 0
      %v346 = vsel %vm332, %v317, 0
      %v349 = vsel %vm332, %v318, 0
      %v352 = vsel %vm332, %v319, 0
      %v355 = vsel %vm332, %v320, 0
      %v358 = vsel %vm332, %v321, 0
      %v361 = vsel %vm332, %v322, 0
      %v364 = vsel %vm332, %v323, 0
      %v367 = vsel %vm332, %v324, 0
      %v370 = vsel %vm332, %v325, 0
      %v373 = vsel %vm332, %v326, 0
      %v376 = vsel %vm332, %v327, 0
      %v379 = vsel %vm332, %v328, 0
      %v382 = vsel %vm332, %v329, 0
      %v385 = vsel %vm332, %v330, 0
      %v388 = vsel %vm332, %v331, 0
      %390 = vmatprep.subr.mxu0 0.0
      %391 = vmatpush1.msra.mxu0 0.0
      %392 = vmatprep.subr.mxu0 0.0
      %393 = vmatpush1.msra.mxu0 0.0
      %394 = vmatprep.subr.mxu0 0.0
      %395 = vmatpush1.msra.mxu0 0.0
      %396 = vmatprep.subr.mxu0 0.0
      %397 = vmatpush1.msra.mxu0 0.0
      %398 = vmatprep.subr.mxu0 0.0
      %399 = vmatpush1.msra.mxu0 0.0
      %400 = vmatprep.subr.mxu0 0.0
      %401 = vmatpush1.msra.mxu0 0.0
      %402 = vmatprep.subr.mxu0 0.0
      %403 = vmatpush1.msra.mxu0 0.0
      %404 = vmatprep.subr.mxu0 0.0
      %405 = vmatpush1.msra.mxu0 0.0
      %406 = vmatprep.subr.mxu0 0.0
      %407 = vmatpush1.msra.mxu0 0.0
      %408 = vmatprep.subr.mxu0 0.0
      %409 = vmatpush1.msra.mxu0 0.0
      %410 = vmatprep.subr.mxu0 0.0
      %411 = vmatpush1.msra.mxu0 0.0
      %412 = vmatprep.subr.mxu0 0.0
      %413 = vmatpush1.msra.mxu0 0.0
      %414 = vmatprep.subr.mxu0 0.0
      %415 = vmatpush1.msra.mxu0 0.0
      %416 = vmatprep.subr.mxu0 0.0
      %417 = vmatpush1.msra.mxu0 0.0
      %418 = vmatprep.subr.mxu0 0.0
      %419 = vmatpush1.msra.mxu0 %v283
      %420 = vmatprep.subr.mxu0 0.0
      %421 = vmatpush1.msra.mxu0 %v282
      %422 = vmatprep.subr.mxu0 0.0
      %423 = vmatpush2.msra.mxu0 0.0
      %424 = vmatprep.subr.mxu0 0.0
      %425 = vmatpush2.msra.mxu0 0.0
      %426 = vmatprep.subr.mxu0 0.0
      %427 = vmatpush2.msra.mxu0 0.0
      %428 = vmatprep.subr.mxu0 0.0
      %429 = vmatpush2.msra.mxu0 0.0
      %430 = vmatprep.subr.mxu0 0.0
      %431 = vmatpush2.msra.mxu0 0.0
      %432 = vmatprep.subr.mxu0 0.0
      %433 = vmatpush2.msra.mxu0 0.0
      %434 = vmatprep.subr.mxu0 0.0
      %435 = vmatpush2.msra.mxu0 0.0
      %436 = vmatprep.subr.mxu0 0.0
      %437 = vmatpush2.msra.mxu0 0.0
      %438 = vmatprep.subr.mxu0 0.0
      %439 = vmatpush2.msra.mxu0 0.0
      %440 = vmatprep.subr.mxu0 0.0
      %441 = vmatpush2.msra.mxu0 0.0
      %442 = vmatprep.subr.mxu0 0.0
      %443 = vmatpush2.msra.mxu0 0.0
      %444 = vmatprep.subr.mxu0 0.0
      %445 = vmatpush2.msra.mxu0 0.0
      %446 = vmatprep.subr.mxu0 0.0
      %447 = vmatpush2.msra.mxu0 0.0
      %448 = vmatprep.subr.mxu0 0.0
      %449 = vmatpush2.msra.mxu0 0.0
      %450 = vmatprep.subr.mxu0 0.0
      %451 = vmatpush2.msra.mxu0 0.0
      %452 = vmatprep.subr.mxu0 0.0
      %453 = vmatpush2.msra.mxu0 0.0
      %454 = vmatprep.mubr.f32.mxu0 0.0
      %455 = vmatmul.mubr.f32.gmra.mxu0 %v334
      %v456 = vpop.f32.mrf.mxu0
      %v457 = vadd.f32 %v297, %v456
      %v458 = vpop.f32.mrf.mxu0
      %459 = vmatprep.mubr.f32.mxu0 0.0
      %460 = vmatmul.mubr.f32.gmra.mxu0 %v337
      %v461 = vpop.f32.mrf.mxu0
      %v462 = vadd.f32 %v297, %v461
      %v463 = vpop.f32.mrf.mxu0
      %464 = vmatprep.mubr.f32.mxu0 0.0
      %465 = vmatmul.mubr.f32.gmra.mxu0 %v340
      %v466 = vpop.f32.mrf.mxu0
      %v467 = vadd.f32 %v297, %v466
      %v468 = vpop.f32.mrf.mxu0
      %469 = vmatprep.mubr.f32.mxu0 0.0
      %470 = vmatmul.mubr.f32.gmra.mxu0 %v343
      %v471 = vpop.f32.mrf.mxu0
      %v472 = vadd.f32 %v297, %v471
      %v473 = vpop.f32.mrf.mxu0
      %474 = vmatprep.mubr.f32.mxu0 0.0
      %475 = vmatmul.mubr.f32.gmra.mxu0 %v346
      %v476 = vpop.f32.mrf.mxu0
      %v477 = vadd.f32 %v297, %v476
      %v478 = vpop.f32.mrf.mxu0
      %479 = vmatprep.mubr.f32.mxu0 0.0
      %480 = vmatmul.mubr.f32.gmra.mxu0 %v349
      %v481 = vpop.f32.mrf.mxu0
      %v482 = vadd.f32 %v297, %v481
      %v483 = vpop.f32.mrf.mxu0
      %484 = vmatprep.mubr.f32.mxu0 0.0
      %485 = vmatmul.mubr.f32.gmra.mxu0 %v352
      %v486 = vpop.f32.mrf.mxu0
      %v487 = vadd.f32 %v297, %v486
      %v488 = vpop.f32.mrf.mxu0
      %489 = vmatprep.mubr.f32.mxu0 0.0
      %490 = vmatmul.mubr.f32.gmra.mxu0 %v355
      %v491 = vpop.f32.mrf.mxu0
      %v492 = vadd.f32 %v297, %v491
      %v493 = vpop.f32.mrf.mxu0
      %494 = vmatprep.mubr.f32.mxu0 0.0
      %495 = vmatmul.mubr.f32.gmra.mxu0 %v358
      %v496 = vpop.f32.mrf.mxu0
      %v497 = vadd.f32 %v297, %v496
      %v498 = vpop.f32.mrf.mxu0
      %499 = vmatprep.mubr.f32.mxu0 0.0
      %500 = vmatmul.mubr.f32.gmra.mxu0 %v361
      %v501 = vpop.f32.mrf.mxu0
      %v502 = vadd.f32 %v297, %v501
      %v503 = vpop.f32.mrf.mxu0
      %504 = vmatprep.mubr.f32.mxu0 0.0
      %505 = vmatmul.mubr.f32.gmra.mxu0 %v364
      %v506 = vpop.f32.mrf.mxu0
      %v507 = vadd.f32 %v297, %v506
      %v508 = vpop.f32.mrf.mxu0
      %509 = vmatprep.mubr.f32.mxu0 0.0
      %510 = vmatmul.mubr.f32.gmra.mxu0 %v367
      %v511 = vpop.f32.mrf.mxu0
      %v512 = vadd.f32 %v297, %v511
      %v513 = vpop.f32.mrf.mxu0
      %514 = vmatprep.mubr.f32.mxu0 0.0
      %515 = vmatmul.mubr.f32.gmra.mxu0 %v370
      %v516 = vpop.f32.mrf.mxu0
      %v517 = vadd.f32 %v297, %v516
      %v518 = vpop.f32.mrf.mxu0
      %519 = vmatprep.mubr.f32.mxu0 0.0
      %520 = vmatmul.mubr.f32.gmra.mxu0 %v373
      %v521 = vpop.f32.mrf.mxu0
      %v522 = vadd.f32 %v297, %v521
      %v523 = vpop.f32.mrf.mxu0
      %524 = vmatprep.mubr.f32.mxu0 0.0
      %525 = vmatmul.mubr.f32.gmra.mxu0 %v376
      %v526 = vpop.f32.mrf.mxu0
      %v527 = vadd.f32 %v297, %v526
      %v528 = vpop.f32.mrf.mxu0
      %529 = vmatprep.mubr.f32.mxu0 0.0
      %530 = vmatmul.mubr.f32.gmra.mxu0 %v379
      %v531 = vpop.f32.mrf.mxu0
      %v532 = vadd.f32 %v297, %v531
      %v533 = vpop.f32.mrf.mxu0
      %534 = vmatprep.mubr.f32.mxu0 0.0
      %535 = vmatmul.mubr.f32.gmra.mxu0 %v382
      %v536 = vpop.f32.mrf.mxu0
      %v537 = vadd.f32 %v297, %v536
      %v538 = vpop.f32.mrf.mxu0
      %539 = vmatprep.mubr.f32.mxu0 0.0
      %540 = vmatmul.mubr.f32.gmra.mxu0 %v385
      %v541 = vpop.f32.mrf.mxu0
      %v542 = vadd.f32 %v297, %v541
      %v543 = vpop.f32.mrf.mxu0
      %544 = vmatprep.mubr.f32.mxu0 0.0
      %545 = vmatmul.mubr.f32.gmra.mxu0 %v388
      %v546 = vpop.f32.mrf.mxu0
      %v547 = vadd.f32 %v297, %v546
      %v548 = vpop.f32.mrf.mxu0
      %549 = vdwg.mxu0
      %v550 = vmul.f32 %v457, 0.5
      %v551 = vmul.f32 %v462, 0.5
      %v552 = vmul.f32 %v467, 0.5
      %v553 = vmul.f32 %v472, 0.5
      %v554 = vmul.f32 %v477, 0.5
      %v555 = vmul.f32 %v482, 0.5
      %v556 = vmul.f32 %v487, 0.5
      %v557 = vmul.f32 %v492, 0.5
      %v558 = vmul.f32 %v497, 0.5
      %v559 = vmul.f32 %v502, 0.5
      %v560 = vmul.f32 %v507, 0.5
      %v561 = vmul.f32 %v512, 0.5
      %v562 = vmul.f32 %v517, 0.5
      %v563 = vmul.f32 %v522, 0.5
      %v564 = vmul.f32 %v527, 0.5
      %v565 = vmul.f32 %v532, 0.5
      %v566 = vmul.f32 %v537, 0.5
      %v567 = vmul.f32 %v542, 0.5
      %v568 = vmul.f32 %v547, 0.5
      %v569 = vmul.f32 %v457, 0.70710677
      %v570 = vmul.f32 %v462, 0.70710677
      %v571 = vmul.f32 %v467, 0.70710677
      %v572 = vmul.f32 %v472, 0.70710677
      %v573 = vmul.f32 %v477, 0.70710677
      %v574 = vmul.f32 %v482, 0.70710677
      %v575 = vmul.f32 %v487, 0.70710677
      %v576 = vmul.f32 %v492, 0.70710677
      %v577 = vmul.f32 %v497, 0.70710677
      %v578 = vmul.f32 %v502, 0.70710677
      %v579 = vmul.f32 %v507, 0.70710677
      %v580 = vmul.f32 %v512, 0.70710677
      %v581 = vmul.f32 %v517, 0.70710677
      %v582 = vmul.f32 %v522, 0.70710677
      %v583 = vmul.f32 %v527, 0.70710677
      %v584 = vmul.f32 %v532, 0.70710677
      %v585 = vmul.f32 %v537, 0.70710677
      %v586 = vmul.f32 %v542, 0.70710677
      %v587 = vmul.f32 %v547, 0.70710677
      %v588 = verf.f32.pop %v569
      %v589 = verf.f32.pop %v570
      %v590 = verf.f32.pop %v571
      %v591 = verf.f32.pop %v572
      %v592 = verf.f32.pop %v573
      %v593 = verf.f32.pop %v574
      %v594 = verf.f32.pop %v575
      %v595 = verf.f32.pop %v576
      %v596 = verf.f32.pop %v577
      %v597 = verf.f32.pop %v578
      %v598 = verf.f32.pop %v579
      %v599 = verf.f32.pop %v580
      %v600 = verf.f32.pop %v581
      %v601 = verf.f32.pop %v582
      %v602 = verf.f32.pop %v583
      %v603 = verf.f32.pop %v584
      %v604 = verf.f32.pop %v585
      %v605 = verf.f32.pop %v586
      %v606 = verf.f32.pop %v587
      %v607 = vadd.f32 %v588, 1.0
      %v608 = vadd.f32 %v589, 1.0
      %v609 = vadd.f32 %v590, 1.0
      %v610 = vadd.f32 %v591, 1.0
      %v611 = vadd.f32 %v592, 1.0
      %v612 = vadd.f32 %v593, 1.0
      %v613 = vadd.f32 %v594, 1.0
      %v614 = vadd.f32 %v595, 1.0
      %v615 = vadd.f32 %v596, 1.0
      %v616 = vadd.f32 %v597, 1.0
      %v617 = vadd.f32 %v598, 1.0
      %v618 = vadd.f32 %v599, 1.0
      %v619 = vadd.f32 %v600, 1.0
      %v620 = vadd.f32 %v601, 1.0
      %v621 = vadd.f32 %v602, 1.0
      %v622 = vadd.f32 %v603, 1.0
      %v623 = vadd.f32 %v604, 1.0
      %v624 = vadd.f32 %v605, 1.0
      %v625 = vadd.f32 %v606, 1.0
      %v626 = vmul.f32 %v550, %v607
      %v627 = vmul.f32 %v551, %v608
      %v628 = vmul.f32 %v552, %v609
      %v629 = vmul.f32 %v553, %v610
      %v630 = vmul.f32 %v554, %v611
      %v631 = vmul.f32 %v555, %v612
      %v632 = vmul.f32 %v556, %v613
      %v633 = vmul.f32 %v557, %v614
      %v634 = vmul.f32 %v558, %v615
      %v635 = vmul.f32 %v559, %v616
      %v636 = vmul.f32 %v560, %v617
      %v637 = vmul.f32 %v561, %v618
      %v638 = vmul.f32 %v562, %v619
      %v639 = vmul.f32 %v563, %v620
      %v640 = vmul.f32 %v564, %v621
      %v641 = vmul.f32 %v565, %v622
      %v642 = vmul.f32 %v566, %v623
      %v643 = vmul.f32 %v567, %v624
      %v644 = vmul.f32 %v568, %v625
      %vm645 = vcmask 261120
      %v647 = vsel %vm645, %v626, 0
      %v650 = vsel %vm645, %v627, 0
      %v653 = vsel %vm645, %v628, 0
      %v656 = vsel %vm645, %v629, 0
      %v659 = vsel %vm645, %v630, 0
      %v662 = vsel %vm645, %v631, 0
      %v665 = vsel %vm645, %v632, 0
      %v668 = vsel %vm645, %v633, 0
      %v671 = vsel %vm645, %v634, 0
      %v674 = vsel %vm645, %v635, 0
      %v677 = vsel %vm645, %v636, 0
      %v680 = vsel %vm645, %v637, 0
      %v683 = vsel %vm645, %v638, 0
      %v686 = vsel %vm645, %v639, 0
      %v689 = vsel %vm645, %v640, 0
      %v692 = vsel %vm645, %v641, 0
      %v695 = vsel %vm645, %v642, 0
      %v698 = vsel %vm645, %v643, 0
      %v701 = vsel %vm645, %v644, 0
      %703 = vmatprep.subr.mxu0 0.0
      %704 = vmatpush1.msra.mxu0 0.0
      %705 = vmatprep.subr.mxu0 0.0
      %706 = vmatpush1.msra.mxu0 0.0
      %707 = vmatprep.subr.mxu0 0.0
      %708 = vmatpush1.msra.mxu0 0.0
      %709 = vmatprep.subr.mxu0 0.0
      %710 = vmatpush1.msra.mxu0 0.0
      %711 = vmatprep.subr.mxu0 0.0
      %712 = vmatpush1.msra.mxu0 0.0
      %713 = vmatprep.subr.mxu0 0.0
      %714 = vmatpush1.msra.mxu0 0.0
      %715 = vmatprep.subr.mxu0 0.0
      %716 = vmatpush1.msra.mxu0 0.0
      %717 = vmatprep.subr.mxu0 0.0
      %718 = vmatpush1.msra.mxu0 0.0
      %719 = vmatprep.subr.mxu0 0.0
      %720 = vmatpush1.msra.mxu0 0.0
      %721 = vmatprep.subr.mxu0 0.0
      %722 = vmatpush1.msra.mxu0 0.0
      %723 = vmatprep.subr.mxu0 0.0
      %724 = vmatpush1.msra.mxu0 0.0
      %725 = vmatprep.subr.mxu0 0.0
      %726 = vmatpush1.msra.mxu0 0.0
      %727 = vmatprep.subr.mxu0 0.0
      %728 = vmatpush1.msra.mxu0 %v287
      %729 = vmatprep.subr.mxu0 0.0
      %730 = vmatpush1.msra.mxu0 %v286
      %731 = vmatprep.subr.mxu0 0.0
      %732 = vmatpush1.msra.mxu0 %v285
      %733 = vmatprep.subr.mxu0 0.0
      %734 = vmatpush1.msra.mxu0 %v284
      %735 = vmatprep.subr.mxu0 0.0
      %736 = vmatpush2.msra.mxu0 0.0
      %737 = vmatprep.subr.mxu0 0.0
      %738 = vmatpush2.msra.mxu0 0.0
      %739 = vmatprep.subr.mxu0 0.0
      %740 = vmatpush2.msra.mxu0 0.0
      %741 = vmatprep.subr.mxu0 0.0
      %742 = vmatpush2.msra.mxu0 0.0
      %743 = vmatprep.subr.mxu0 0.0
      %744 = vmatpush2.msra.mxu0 0.0
      %745 = vmatprep.subr.mxu0 0.0
      %746 = vmatpush2.msra.mxu0 0.0
      %747 = vmatprep.subr.mxu0 0.0
      %748 = vmatpush2.msra.mxu0 0.0
      %749 = vmatprep.subr.mxu0 0.0
      %750 = vmatpush2.msra.mxu0 0.0
      %751 = vmatprep.subr.mxu0 0.0
      %752 = vmatpush2.msra.mxu0 0.0
      %753 = vmatprep.subr.mxu0 0.0
      %754 = vmatpush2.msra.mxu0 0.0
      %755 = vmatprep.subr.mxu0 0.0
      %756 = vmatpush2.msra.mxu0 0.0
      %757 = vmatprep.subr.mxu0 0.0
      %758 = vmatpush2.msra.mxu0 0.0
      %759 = vmatprep.subr.mxu0 0.0
      %760 = vmatpush2.msra.mxu0 0.0
      %761 = vmatprep.subr.mxu0 0.0
      %762 = vmatpush2.msra.mxu0 0.0
      %763 = vmatprep.subr.mxu0 0.0
      %764 = vmatpush2.msra.mxu0 0.0
      %765 = vmatprep.subr.mxu0 0.0
      %766 = vmatpush2.msra.mxu0 0.0
      %767 = vmatprep.mubr.f32.mxu0 0.0
      %768 = vmatmul.mubr.f32.gmra.mxu0 %v647
      %v769 = vpop.f32.mrf.mxu0
      %v770 = vadd.f32 %v304, %v769
      %v771 = vpop.f32.mrf.mxu0
      %772 = vmatprep.mubr.f32.mxu0 0.0
      %773 = vmatmul.mubr.f32.gmra.mxu0 %v650
      %v774 = vpop.f32.mrf.mxu0
      %v775 = vadd.f32 %v304, %v774
      %v776 = vpop.f32.mrf.mxu0
      %777 = vmatprep.mubr.f32.mxu0 0.0
      %778 = vmatmul.mubr.f32.gmra.mxu0 %v653
      %v779 = vpop.f32.mrf.mxu0
      %v780 = vadd.f32 %v304, %v779
      %v781 = vpop.f32.mrf.mxu0
      %782 = vmatprep.mubr.f32.mxu0 0.0
      %783 = vmatmul.mubr.f32.gmra.mxu0 %v656
      %v784 = vpop.f32.mrf.mxu0
      %v785 = vadd.f32 %v304, %v784
      %v786 = vpop.f32.mrf.mxu0
      %787 = vmatprep.mubr.f32.mxu0 0.0
      %788 = vmatmul.mubr.f32.gmra.mxu0 %v659
      %v789 = vpop.f32.mrf.mxu0
      %v790 = vadd.f32 %v304, %v789
      %v791 = vpop.f32.mrf.mxu0
      %792 = vmatprep.mubr.f32.mxu0 0.0
      %793 = vmatmul.mubr.f32.gmra.mxu0 %v662
      %v794 = vpop.f32.mrf.mxu0
      %v795 = vadd.f32 %v304, %v794
      %v796 = vpop.f32.mrf.mxu0
      %797 = vmatprep.mubr.f32.mxu0 0.0
      %798 = vmatmul.mubr.f32.gmra.mxu0 %v665
      %v799 = vpop.f32.mrf.mxu0
      %v800 = vadd.f32 %v304, %v799
      %v801 = vpop.f32.mrf.mxu0
      %802 = vmatprep.mubr.f32.mxu0 0.0
      %803 = vmatmul.mubr.f32.gmra.mxu0 %v668
      %v804 = vpop.f32.mrf.mxu0
      %v805 = vadd.f32 %v304, %v804
      %v806 = vpop.f32.mrf.mxu0
      %807 = vmatprep.mubr.f32.mxu0 0.0
      %808 = vmatmul.mubr.f32.gmra.mxu0 %v671
      %v809 = vpop.f32.mrf.mxu0
      %v810 = vadd.f32 %v304, %v809
      %v811 = vpop.f32.mrf.mxu0
      %812 = vmatprep.mubr.f32.mxu0 0.0
      %813 = vmatmul.mubr.f32.gmra.mxu0 %v674
      %v814 = vpop.f32.mrf.mxu0
      %v815 = vadd.f32 %v304, %v814
      %v816 = vpop.f32.mrf.mxu0
      %817 = vmatprep.mubr.f32.mxu0 0.0
      %818 = vmatmul.mubr.f32.gmra.mxu0 %v677
      %v819 = vpop.f32.mrf.mxu0
      %v820 = vadd.f32 %v304, %v819
      %v821 = vpop.f32.mrf.mxu0
      %822 = vmatprep.mubr.f32.mxu0 0.0
      %823 = vmatmul.mubr.f32.gmra.mxu0 %v680
      %v824 = vpop.f32.mrf.mxu0
      %v825 = vadd.f32 %v304, %v824
      %v826 = vpop.f32.mrf.mxu0
      %827 = vmatprep.mubr.f32.mxu0 0.0
      %828 = vmatmul.mubr.f32.gmra.mxu0 %v683
      %v829 = vpop.f32.mrf.mxu0
      %v830 = vadd.f32 %v304, %v829
      %v831 = vpop.f32.mrf.mxu0
      %832 = vmatprep.mubr.f32.mxu0 0.0
      %833 = vmatmul.mubr.f32.gmra.mxu0 %v686
      %v834 = vpop.f32.mrf.mxu0
      %v835 = vadd.f32 %v304, %v834
      %v836 = vpop.f32.mrf.mxu0
      %837 = vmatprep.mubr.f32.mxu0 0.0
      %838 = vmatmul.mubr.f32.gmra.mxu0 %v689
      %v839 = vpop.f32.mrf.mxu0
      %v840 = vadd.f32 %v304, %v839
      %v841 = vpop.f32.mrf.mxu0
      %842 = vmatprep.mubr.f32.mxu0 0.0
      %843 = vmatmul.mubr.f32.gmra.mxu0 %v692
      %v844 = vpop.f32.mrf.mxu0
      %v845 = vadd.f32 %v304, %v844
      %v846 = vpop.f32.mrf.mxu0
      %847 = vmatprep.mubr.f32.mxu0 0.0
      %848 = vmatmul.mubr.f32.gmra.mxu0 %v695
      %v849 = vpop.f32.mrf.mxu0
      %v850 = vadd.f32 %v304, %v849
      %v851 = vpop.f32.mrf.mxu0
      %852 = vmatprep.mubr.f32.mxu0 0.0
      %853 = vmatmul.mubr.f32.gmra.mxu0 %v698
      %v854 = vpop.f32.mrf.mxu0
      %v855 = vadd.f32 %v304, %v854
      %v856 = vpop.f32.mrf.mxu0
      %857 = vmatprep.mubr.f32.mxu0 0.0
      %858 = vmatmul.mubr.f32.gmra.mxu0 %v701
      %v859 = vpop.f32.mrf.mxu0
      %v860 = vadd.f32 %v304, %v859
      %v861 = vpop.f32.mrf.mxu0
      %862 = vdwg.mxu0
      %v863 = vmul.f32 %v770, 0.5
      %v864 = vmul.f32 %v775, 0.5
      %v865 = vmul.f32 %v780, 0.5
      %v866 = vmul.f32 %v785, 0.5
      %v867 = vmul.f32 %v790, 0.5
      %v868 = vmul.f32 %v795, 0.5
      %v869 = vmul.f32 %v800, 0.5
      %v870 = vmul.f32 %v805, 0.5
      %v871 = vmul.f32 %v810, 0.5
      %v872 = vmul.f32 %v815, 0.5
      %v873 = vmul.f32 %v820, 0.5
      %v874 = vmul.f32 %v825, 0.5
      %v875 = vmul.f32 %v830, 0.5
      %v876 = vmul.f32 %v835, 0.5
      %v877 = vmul.f32 %v840, 0.5
      %v878 = vmul.f32 %v845, 0.5
      %v879 = vmul.f32 %v850, 0.5
      %v880 = vmul.f32 %v855, 0.5
      %v881 = vmul.f32 %v860, 0.5
      %v882 = vmul.f32 %v770, 0.70710677
      %v883 = vmul.f32 %v775, 0.70710677
      %v884 = vmul.f32 %v780, 0.70710677
      %v885 = vmul.f32 %v785, 0.70710677
      %v886 = vmul.f32 %v790, 0.70710677
      %v887 = vmul.f32 %v795, 0.70710677
      %v888 = vmul.f32 %v800, 0.70710677
      %v889 = vmul.f32 %v805, 0.70710677
      %v890 = vmul.f32 %v810, 0.70710677
      %v891 = vmul.f32 %v815, 0.70710677
      %v892 = vmul.f32 %v820, 0.70710677
      %v893 = vmul.f32 %v825, 0.70710677
      %v894 = vmul.f32 %v830, 0.70710677
      %v895 = vmul.f32 %v835, 0.70710677
      %v896 = vmul.f32 %v840, 0.70710677
      %v897 = vmul.f32 %v845, 0.70710677
      %v898 = vmul.f32 %v850, 0.70710677
      %v899 = vmul.f32 %v855, 0.70710677
      %v900 = vmul.f32 %v860, 0.70710677
      %v901 = verf.f32.pop %v882
      %v902 = verf.f32.pop %v883
      %v903 = verf.f32.pop %v884
      %v904 = verf.f32.pop %v885
      %v905 = verf.f32.pop %v886
      %v906 = verf.f32.pop %v887
      %v907 = verf.f32.pop %v888
      %v908 = verf.f32.pop %v889
      %v909 = verf.f32.pop %v890
      %v910 = verf.f32.pop %v891
      %v911 = verf.f32.pop %v892
      %v912 = verf.f32.pop %v893
      %v913 = verf.f32.pop %v894
      %v914 = verf.f32.pop %v895
      %v915 = verf.f32.pop %v896
      %v916 = verf.f32.pop %v897
      %v917 = verf.f32.pop %v898
      %v918 = verf.f32.pop %v899
      %v919 = verf.f32.pop %v900
      %v920 = vadd.f32 %v901, 1.0
      %v921 = vadd.f32 %v902, 1.0
      %v922 = vadd.f32 %v903, 1.0
      %v923 = vadd.f32 %v904, 1.0
      %v924 = vadd.f32 %v905, 1.0
      %v925 = vadd.f32 %v906, 1.0
      %v926 = vadd.f32 %v907, 1.0
      %v927 = vadd.f32 %v908, 1.0
      %v928 = vadd.f32 %v909, 1.0
      %v929 = vadd.f32 %v910, 1.0
      %v930 = vadd.f32 %v911, 1.0
      %v931 = vadd.f32 %v912, 1.0
      %v932 = vadd.f32 %v913, 1.0
      %v933 = vadd.f32 %v914, 1.0
      %v934 = vadd.f32 %v915, 1.0
      %v935 = vadd.f32 %v916, 1.0
      %v936 = vadd.f32 %v917, 1.0
      %v937 = vadd.f32 %v918, 1.0
      %v938 = vadd.f32 %v919, 1.0
      %v939 = vmul.f32 %v863, %v920
      %v940 = vmul.f32 %v864, %v921
      %v941 = vmul.f32 %v865, %v922
      %v942 = vmul.f32 %v866, %v923
      %v943 = vmul.f32 %v867, %v924
      %v944 = vmul.f32 %v868, %v925
      %v945 = vmul.f32 %v869, %v926
      %v946 = vmul.f32 %v870, %v927
      %v947 = vmul.f32 %v871, %v928
      %v948 = vmul.f32 %v872, %v929
      %v949 = vmul.f32 %v873, %v930
      %v950 = vmul.f32 %v874, %v931
      %v951 = vmul.f32 %v875, %v932
      %v952 = vmul.f32 %v876, %v933
      %v953 = vmul.f32 %v877, %v934
      %v954 = vmul.f32 %v878, %v935
      %v955 = vmul.f32 %v879, %v936
      %v956 = vmul.f32 %v880, %v937
      %v957 = vmul.f32 %v881, %v938
      %v959 = vsel %vm645, %v939, 0
      %v962 = vsel %vm645, %v940, 0
      %v965 = vsel %vm645, %v941, 0
      %v968 = vsel %vm645, %v942, 0
      %v971 = vsel %vm645, %v943, 0
      %v974 = vsel %vm645, %v944, 0
      %v977 = vsel %vm645, %v945, 0
      %v980 = vsel %vm645, %v946, 0
      %v983 = vsel %vm645, %v947, 0
      %v986 = vsel %vm645, %v948, 0
      %v989 = vsel %vm645, %v949, 0
      %v992 = vsel %vm645, %v950, 0
      %v995 = vsel %vm645, %v951, 0
      %v998 = vsel %vm645, %v952, 0
      %v1001 = vsel %vm645, %v953, 0
      %v1004 = vsel %vm645, %v954, 0
      %v1007 = vsel %vm645, %v955, 0
      %v1010 = vsel %vm645, %v956, 0
      %v1013 = vsel %vm645, %v957, 0
      %1015 = vmatprep.subr.mxu0 0.0
      %1016 = vmatpush1.msra.mxu0 0.0
      %1017 = vmatprep.subr.mxu0 0.0
      %1018 = vmatpush1.msra.mxu0 0.0
      %1019 = vmatprep.subr.mxu0 0.0
      %1020 = vmatpush1.msra.mxu0 0.0
      %1021 = vmatprep.subr.mxu0 0.0
      %1022 = vmatpush1.msra.mxu0 0.0
      %1023 = vmatprep.subr.mxu0 0.0
      %1024 = vmatpush1.msra.mxu0 0.0
      %1025 = vmatprep.subr.mxu0 0.0
      %1026 = vmatpush1.msra.mxu0 0.0
      %1027 = vmatprep.subr.mxu0 0.0
      %1028 = vmatpush1.msra.mxu0 0.0
      %1029 = vmatprep.subr.mxu0 0.0
      %1030 = vmatpush1.msra.mxu0 0.0
      %1031 = vmatprep.subr.mxu0 0.0
      %1032 = vmatpush1.msra.mxu0 0.0
      %1033 = vmatprep.subr.mxu0 0.0
      %1034 = vmatpush1.msra.mxu0 0.0
      %1035 = vmatprep.subr.mxu0 0.0
      %1036 = vmatpush1.msra.mxu0 0.0
      %1037 = vmatprep.subr.mxu0 0.0
      %1038 = vmatpush1.msra.mxu0 0.0
      %1039 = vmatprep.subr.mxu0 0.0
      %1040 = vmatpush1.msra.mxu0 %v291
      %1041 = vmatprep.subr.mxu0 0.0
      %1042 = vmatpush1.msra.mxu0 %v290
      %1043 = vmatprep.subr.mxu0 0.0
      %1044 = vmatpush1.msra.mxu0 %v289
      %1045 = vmatprep.subr.mxu0 0.0
      %1046 = vmatpush1.msra.mxu0 %v288
      %1047 = vmatprep.subr.mxu0 0.0
      %1048 = vmatpush2.msra.mxu0 0.0
      %1049 = vmatprep.subr.mxu0 0.0
      %1050 = vmatpush2.msra.mxu0 0.0
      %1051 = vmatprep.subr.mxu0 0.0
      %1052 = vmatpush2.msra.mxu0 0.0
      %1053 = vmatprep.subr.mxu0 0.0
      %1054 = vmatpush2.msra.mxu0 0.0
      %1055 = vmatprep.subr.mxu0 0.0
      %1056 = vmatpush2.msra.mxu0 0.0
      %1057 = vmatprep.subr.mxu0 0.0
      %1058 = vmatpush2.msra.mxu0 0.0
      %1059 = vmatprep.subr.mxu0 0.0
      %1060 = vmatpush2.msra.mxu0 0.0
      %1061 = vmatprep.subr.mxu0 0.0
      %1062 = vmatpush2.msra.mxu0 0.0
      %1063 = vmatprep.subr.mxu0 0.0
      %1064 = vmatpush2.msra.mxu0 0.0
      %1065 = vmatprep.subr.mxu0 0.0
      %1066 = vmatpush2.msra.mxu0 0.0
      %1067 = vmatprep.subr.mxu0 0.0
      %1068 = vmatpush2.msra.mxu0 0.0
      %1069 = vmatprep.subr.mxu0 0.0
      %1070 = vmatpush2.msra.mxu0 0.0
      %1071 = vmatprep.subr.mxu0 0.0
      %1072 = vmatpush2.msra.mxu0 0.0
      %1073 = vmatprep.subr.mxu0 0.0
      %1074 = vmatpush2.msra.mxu0 0.0
      %1075 = vmatprep.subr.mxu0 0.0
      %1076 = vmatpush2.msra.mxu0 0.0
      %1077 = vmatprep.subr.mxu0 0.0
      %1078 = vmatpush2.msra.mxu0 0.0
      %1079 = vmatprep.mubr.f32.mxu0 0.0
      %1080 = vmatmul.mubr.f32.gmra.mxu0 %v959
      %v1081 = vpop.f32.mrf.mxu0
      %v1082 = vadd.f32 %v311, %v1081
      %v1083 = vpop.f32.mrf.mxu0
      %1084 = vmatprep.mubr.f32.mxu0 0.0
      %1085 = vmatmul.mubr.f32.gmra.mxu0 %v962
      %v1086 = vpop.f32.mrf.mxu0
      %v1087 = vadd.f32 %v311, %v1086
      %v1088 = vpop.f32.mrf.mxu0
      %1089 = vmatprep.mubr.f32.mxu0 0.0
      %1090 = vmatmul.mubr.f32.gmra.mxu0 %v965
      %v1091 = vpop.f32.mrf.mxu0
      %v1092 = vadd.f32 %v311, %v1091
      %v1093 = vpop.f32.mrf.mxu0
      %1094 = vmatprep.mubr.f32.mxu0 0.0
      %1095 = vmatmul.mubr.f32.gmra.mxu0 %v968
      %v1096 = vpop.f32.mrf.mxu0
      %v1097 = vadd.f32 %v311, %v1096
      %v1098 = vpop.f32.mrf.mxu0
      %1099 = vmatprep.mubr.f32.mxu0 0.0
      %1100 = vmatmul.mubr.f32.gmra.mxu0 %v971
      %v1101 = vpop.f32.mrf.mxu0
      %v1102 = vadd.f32 %v311, %v1101
      %v1103 = vpop.f32.mrf.mxu0
      %1104 = vmatprep.mubr.f32.mxu0 0.0
      %1105 = vmatmul.mubr.f32.gmra.mxu0 %v974
      %v1106 = vpop.f32.mrf.mxu0
      %v1107 = vadd.f32 %v311, %v1106
      %v1108 = vpop.f32.mrf.mxu0
      %1109 = vmatprep.mubr.f32.mxu0 0.0
      %1110 = vmatmul.mubr.f32.gmra.mxu0 %v977
      %v1111 = vpop.f32.mrf.mxu0
      %v1112 = vadd.f32 %v311, %v1111
      %v1113 = vpop.f32.mrf.mxu0
      %1114 = vmatprep.mubr.f32.mxu0 0.0
      %1115 = vmatmul.mubr.f32.gmra.mxu0 %v980
      %v1116 = vpop.f32.mrf.mxu0
      %v1117 = vadd.f32 %v311, %v1116
      %v1118 = vpop.f32.mrf.mxu0
      %1119 = vmatprep.mubr.f32.mxu0 0.0
      %1120 = vmatmul.mubr.f32.gmra.mxu0 %v983
      %v1121 = vpop.f32.mrf.mxu0
      %v1122 = vadd.f32 %v311, %v1121
      %v1123 = vpop.f32.mrf.mxu0
      %1124 = vmatprep.mubr.f32.mxu0 0.0
      %1125 = vmatmul.mubr.f32.gmra.mxu0 %v986
      %v1126 = vpop.f32.mrf.mxu0
      %v1127 = vadd.f32 %v311, %v1126
      %v1128 = vpop.f32.mrf.mxu0
      %1129 = vmatprep.mubr.f32.mxu0 0.0
      %1130 = vmatmul.mubr.f32.gmra.mxu0 %v989
      %v1131 = vpop.f32.mrf.mxu0
      %v1132 = vadd.f32 %v311, %v1131
      %v1133 = vpop.f32.mrf.mxu0
      %1134 = vmatprep.mubr.f32.mxu0 0.0
      %1135 = vmatmul.mubr.f32.gmra.mxu0 %v992
      %v1136 = vpop.f32.mrf.mxu0
      %v1137 = vadd.f32 %v311, %v1136
      %v1138 = vpop.f32.mrf.mxu0
      %1139 = vmatprep.mubr.f32.mxu0 0.0
      %1140 = vmatmul.mubr.f32.gmra.mxu0 %v995
      %v1141 = vpop.f32.mrf.mxu0
      %v1142 = vadd.f32 %v311, %v1141
      %v1143 = vpop.f32.mrf.mxu0
      %1144 = vmatprep.mubr.f32.mxu0 0.0
      %1145 = vmatmul.mubr.f32.gmra.mxu0 %v998
      %v1146 = vpop.f32.mrf.mxu0
      %v1147 = vadd.f32 %v311, %v1146
      %v1148 = vpop.f32.mrf.mxu0
      %1149 = vmatprep.mubr.f32.mxu0 0.0
      %1150 = vmatmul.mubr.f32.gmra.mxu0 %v1001
      %v1151 = vpop.f32.mrf.mxu0
      %v1152 = vadd.f32 %v311, %v1151
      %v1153 = vpop.f32.mrf.mxu0
      %1154 = vmatprep.mubr.f32.mxu0 0.0
      %1155 = vmatmul.mubr.f32.gmra.mxu0 %v1004
      %v1156 = vpop.f32.mrf.mxu0
      %v1157 = vadd.f32 %v311, %v1156
      %v1158 = vpop.f32.mrf.mxu0
      %1159 = vmatprep.mubr.f32.mxu0 0.0
      %1160 = vmatmul.mubr.f32.gmra.mxu0 %v1007
      %v1161 = vpop.f32.mrf.mxu0
      %v1162 = vadd.f32 %v311, %v1161
      %v1163 = vpop.f32.mrf.mxu0
      %1164 = vmatprep.mubr.f32.mxu0 0.0
      %1165 = vmatmul.mubr.f32.gmra.mxu0 %v1010
      %v1166 = vpop.f32.mrf.mxu0
      %v1167 = vadd.f32 %v311, %v1166
      %v1168 = vpop.f32.mrf.mxu0
      %1169 = vmatprep.mubr.f32.mxu0 0.0
      %1170 = vmatmul.mubr.f32.gmra.mxu0 %v1013
      %v1171 = vpop.f32.mrf.mxu0
      %v1172 = vadd.f32 %v311, %v1171
      %v1173 = vpop.f32.mrf.mxu0
      %1174 = vdwg.mxu0
      %vm1175 = vcmask 64512
      %1176 = vst.msk [vmem:[%s280] sm:$0xff] %vm1175, %v1082
      %1177 = vst.msk [vmem:[%s280 + $0x8] sm:$0xff] %vm1175, %v1087
      %1178 = vst.msk [vmem:[%s280 + $0x10] sm:$0xff] %vm1175, %v1092
      %1179 = vst.msk [vmem:[%s280 + $0x18] sm:$0xff] %vm1175, %v1097
      %1180 = vst.msk [vmem:[%s280 + $0x20] sm:$0xff] %vm1175, %v1102
      %1181 = vst.msk [vmem:[%s280 + $0x28] sm:$0xff] %vm1175, %v1107
      %1182 = vst.msk [vmem:[%s280 + $0x30] sm:$0xff] %vm1175, %v1112
      %1183 = vst.msk [vmem:[%s280 + $0x38] sm:$0xff] %vm1175, %v1117
      %1184 = vst.msk [vmem:[%s280 + $0x40] sm:$0xff] %vm1175, %v1122
      %1185 = vst.msk [vmem:[%s280 + $0x48] sm:$0xff] %vm1175, %v1127
      %1186 = vst.msk [vmem:[%s280 + $0x50] sm:$0xff] %vm1175, %v1132
      %1187 = vst.msk [vmem:[%s280 + $0x58] sm:$0xff] %vm1175, %v1137
      %1188 = vst.msk [vmem:[%s280 + $0x60] sm:$0xff] %vm1175, %v1142
      %1189 = vst.msk [vmem:[%s280 + $0x68] sm:$0xff] %vm1175, %v1147
      %1190 = vst.msk [vmem:[%s280 + $0x70] sm:$0xff] %vm1175, %v1152
      %1191 = vst.msk [vmem:[%s280 + $0x78] sm:$0xff] %vm1175, %v1157
      %1192 = vst.msk [vmem:[%s280 + $0x80] sm:$0xff] %vm1175, %v1162
      %1193 = vst.msk [vmem:[%s280 + $0x88] sm:$0xff] %vm1175, %v1167
      %1194 = vst.msk [vmem:[%s280 + $0x90] sm:$0xff] %vm1175, %v1172
      %s1195 = smul.u32 19, %s18
      %p1196 = scmp.lt.s32.totalorder %s1195, 37
      %s1197 = scalar_select %p1196, %s1195, 37
      %s1198 = smul.addr %s1197, 8
      %s1199 = scalar_lea.vmem %s7, %s1198
      // Predicated region
      $region49: #{tpu_custom_call.1} parent=47 // pred_check
        %p1200 = pneg %p188
      $region50: #{tpu_custom_call.1} parent=47 // pred_check_branch
        %1202 = sbr.rel (%p1200) target = $region52
      $region51: #{tpu_custom_call.1} parent=47 // pred_region
        %s1203 = smul.u32 19, %s18
      $region52: #{tpu_custom_call.1} parent=47 // pred_fallthru
        _
    $region48: #{tpu_custom_call.1} parent=5 // pred_fallthru
      _
    %p1204 = scmp.le.s32.totalorder 2, %s13
    // Predicated region
    $region53: #{tpu_custom_call.1} parent=5 // pred_check
      %p1205 = pneg %p1204
    $region54: #{tpu_custom_call.1} parent=5 // pred_check_branch
      %1207 = sbr.rel (%p1205) target = $region56
    $region55: #{tpu_custom_call.1} parent=5 // pred_region
      %s1208 = ssub.s32 %s13, 2
      // Predicated region
      $region57: #{tpu_custom_call.1} parent=55 // pred_check
        %p1209 = pneg %p194
      $region58: #{tpu_custom_call.1} parent=55 // pred_check_branch
        %1211 = sbr.rel (%p1209) target = $region60
      $region59: #{tpu_custom_call.1} parent=55 // pred_region
        %s1212 = smul.u32 19, %s19
        %p1213 = scmp.lt.s32.totalorder %s1212, 37
        %s1214 = scalar_select %p1213, %s1212, 37
        %s1215 = smul.addr %s1214, 8
        %s1216 = scalar_lea.vmem %s7, %s1215
      $region60: #{tpu_custom_call.1} parent=55 // pred_fallthru
        _
    $region56: #{tpu_custom_call.1} parent=5 // pred_fallthru
      _
  $region6: #{tpu_custom_call.1} parent=0 // loop_footer
    %s17 = sadd.s32 1, %s13
  $region7: #{tpu_custom_call.1} parent=0 // loop_footer_branch
    %12 = sbr.rel target = $region3
  $region8: #{tpu_custom_call.1} parent=0 // loop_exit
    _

</llo_original>
